<compile_context>
chip_gen: v7x
topology: tpu7x:2x2x1
jax: 0.10.0
libtpu: 0.0.40
codegen_flags: <defaults>
</compile_context>

<pallas_src>
import functools

import jax
import jax.numpy as jnp
from jax import lax
from jax.experimental import pallas as pl
from jax.experimental.pallas import tpu as pltpu

_NUM_CORES = 2                              # leading "parallel" grid axis (v7x megacore)
_TILE_BYTES_PER_INPUT = 4 * 1024 * 1024     # per mel input, per pipeline buffer
_OUT_LANES = 128                            # lane-padded output row (losses in lanes 0..n)


def _round_up(x, m):
    return ((x + m - 1) // m) * m


def _cdiv(a, b):
    return (a + b - 1) // b


def _fused_loss_kernel(*refs, n_pred, tile_r, slab_h, cols, rows,
                       steps_per_core, inv_mel_n, inv_pred_n):
    """refs = (mel_a, mel_b, p0, t0, ..., out, acc_scratch)."""
    mel_a_ref, mel_b_ref = refs[0], refs[1]
    pred_refs = refs[2:2 + 2 * n_pred]
    out_ref = refs[2 + 2 * n_pred]
    acc_ref = refs[3 + 2 * n_pred]

    core = pl.program_id(0)        # which TensorCore's slice of row-blocks
    step = pl.program_id(1)        # reduction step within this core

    @pl.when(step == 0)
    def _init():
        acc_ref[...] = jnp.zeros_like(acc_ref)

    # Global row offset of this block (for boundary masking).
    base_row = (core * steps_per_core + step) * tile_r

    # Stream the (tile_r, cols) VMEM tile in slab_h-row slabs; hot loop stays
    # on the VPU (no cross-lane reduction per step).  OOB rows of the ragged
    # boundary block are masked out via a global-row iota.
    num_slabs = tile_r // slab_h
    local_iota = lax.broadcasted_iota(jnp.int32, (slab_h, cols), 0)

    def body(s, carry):
        r0 = pl.multiple_of(s * slab_h, slab_h)
        a = mel_a_ref[pl.ds(r0, slab_h), :].astype(jnp.float32)
        b = mel_b_ref[pl.ds(r0, slab_h), :].astype(jnp.float32)
        row_ids = (base_row + r0) + local_iota
        return carry + jnp.where(row_ids < rows, jnp.abs(a - b), 0.0)

    partial = lax.fori_loop(0, num_slabs, body,
                            jnp.zeros((slab_h, cols), jnp.float32),
                            unroll=min(8, num_slabs))
    acc_ref[...] += partial

    # Last step of this core only: one cross-lane reduction for the mel partial
    # plus the tiny predictor MSE losses (full-array resident side inputs).
    @pl.when(step == pl.num_programs(1) - 1)
    def _finalize():
        lane = lax.broadcasted_iota(jnp.int32, (1, _OUT_LANES), 1)
        mel_partial = jnp.sum(acc_ref[...], keepdims=True) * inv_mel_n   # (1,1)
        vec = jnp.where(lane == 0, mel_partial, 0.0)
        for i in range(n_pred):
            p = pred_refs[2 * i][...].astype(jnp.float32)
            t = pred_refs[2 * i + 1][...].astype(jnp.float32)
            d = p - t
            mse = jnp.sum(d * d, keepdims=True) * inv_pred_n[i]          # (1,1)
            vec = jnp.where(lane == (1 + i), mse, vec)
        out_ref[0] = vec


def _as_2d(x):
    """Zero-copy 2D view: collapse leading dims (no jnp.pad, no HBM round-trip)."""
    if x.ndim >= 2:
        return x.reshape(-1, x.shape[-1])
    return x.reshape(1, -1)


def fastspeech_loss(pred_mel, spectrogram, predicted, predictor_targets):
    """JAX/Pallas equivalent of FastSpeechLoss.forward (single fused kernel)."""
    assert len(predicted) == len(predictor_targets)
    assert pred_mel.shape == spectrogram.shape, (pred_mel.shape, spectrogram.shape)
    n_pred = len(predicted)
    mel_size = int(pred_mel.size)
    assert mel_size > 0, "empty mel tensor"

    mel_a = _as_2d(pred_mel)
    mel_b = _as_2d(spectrogram)
    rows, cols = mel_a.shape

    # dtype-aware slab height: one full packed vreg sublane group per load.
    a_itemsize = jnp.dtype(mel_a.dtype).itemsize
    b_itemsize = jnp.dtype(mel_b.dtype).itemsize
    slab_h = {4: 8, 2: 16, 1: 32}.get(a_itemsize, 8)

    # Balanced tiling: n_blocks is a multiple of _NUM_CORES (no wasted blocks),
    # each tile <= ~4 MiB per input per buffer -> ~16 MiB resident (2 in x 2 buf).
    cols_pad = _round_up(cols, 128)
    bytes_per_row = cols_pad * max(a_itemsize, b_itemsize)
    max_tile_r = max(slab_h, (_TILE_BYTES_PER_INPUT // bytes_per_row) // slab_h * slab_h)
    n_blocks = _NUM_CORES * _cdiv(_cdiv(rows, max_tile_r), _NUM_CORES)
    tile_r = _round_up(_cdiv(rows, n_blocks), slab_h)
    steps_per_core = n_blocks // _NUM_CORES
    grid = (_NUM_CORES, steps_per_core)

    in_specs = [
        pl.BlockSpec((tile_r, cols), lambda c, k: (c * steps_per_core + k, 0)),
        pl.BlockSpec((tile_r, cols), lambda c, k: (c * steps_per_core + k, 0)),
    ]

    pred_args = []
    inv_pred_n = []
    for p, t in zip(predicted, predictor_targets):
        assert p.shape == t.shape, (p.shape, t.shape)
        assert p.size > 0, "empty predictor tensor"
        p2 = p.reshape(1, -1)   # original dtype preserved; cast happens in-kernel
        t2 = t.reshape(1, -1)
        pred_args += [p2, t2]
        inv_pred_n.append(1.0 / float(p.size))
        # Tiny side inputs: full-array resident blocks (block == full dims).
        in_specs.append(pl.BlockSpec(p2.shape, lambda c, k: (0, 0)))
        in_specs.append(pl.BlockSpec(t2.shape, lambda c, k: (0, 0)))

    # One lane-padded output row per core: lane 0 = mel partial (already scaled
    # by 1/N), lanes 1..n_pred = predictor MSEs (identical on both cores).
    out_shape = jax.ShapeDtypeStruct((_NUM_CORES, 1, _OUT_LANES), jnp.float32)
    out_specs = pl.BlockSpec((1, 1, _OUT_LANES), lambda c, k: (c, 0, 0))

    kernel = functools.partial(
        _fused_loss_kernel,
        n_pred=n_pred,
        tile_r=tile_r,
        slab_h=slab_h,
        cols=cols,
        rows=rows,
        steps_per_core=steps_per_core,
        inv_mel_n=1.0 / float(mel_size),
        inv_pred_n=tuple(inv_pred_n),
    )

    out = pl.pallas_call(
        kernel,
        out_shape=out_shape,
        grid_spec=pltpu.PrefetchScalarGridSpec(
            num_scalar_prefetch=0,
            grid=grid,
            in_specs=in_specs,
            out_specs=out_specs,
            scratch_shapes=[pltpu.VMEM((slab_h, cols), jnp.float32)],
        ),
        compiler_params=pltpu.CompilerParams(
            # Core axis shards across TCs on v7x; reduction axis is serial.
            dimension_semantics=("parallel", "arbitrary"),
            # ~16 MiB mel tiles + small residents; safe on v5e/v6e/v7x.
            vmem_limit_bytes=32 * 1024 * 1024,
        ),
    )(mel_a, mel_b, *pred_args)

    mel_loss = jnp.sum(out[:, 0, 0])                      # add per-core partials
    pred_losses = tuple(out[0, 0, 1 + i] for i in range(n_pred))
    return (mel_loss, *pred_losses)


if __name__ == "__main__":
    key = jax.random.PRNGKey(0)
    k = jax.random.split(key, 8)

    B, T, N_MELS = 2, 16, 32  # small synthetic shapes

    pred_mel = jax.random.normal(k[0], (B, T, N_MELS), dtype=jnp.float32)
    spectrogram = jax.random.normal(k[1], (B, T, N_MELS), dtype=jnp.float32)

    # predicted: (duration, pitch, energy), each (B, T) float32
    predicted = (
        jax.random.normal(k[2], (B, T), dtype=jnp.float32),
        jax.random.normal(k[3], (B, T), dtype=jnp.float32),
        jax.random.normal(k[4], (B, T), dtype=jnp.float32),
    )
    # targets: duration is integer (cast to float inside the kernel, like torch .float())
    predictor_targets = (
        jax.random.randint(k[5], (B, T), 0, 10, dtype=jnp.int32),
        jax.random.normal(k[6], (B, T), dtype=jnp.float32),
        jax.random.normal(k[7], (B, T), dtype=jnp.float32),
    )

    loss_fn = jax.jit(fastspeech_loss)
    losses = loss_fn(pred_mel, spectrogram, predicted, predictor_targets)
    losses = jax.block_until_ready(losses)

    # reference check in plain JAX
    ref_mel = jnp.mean(jnp.abs(pred_mel - spectrogram))
    ref_pred = [
        jnp.mean((predicted[i] - predictor_targets[i].astype(jnp.float32)) ** 2)
        for i in range(3)
    ]
    ref = (ref_mel, *ref_pred)
    for got, want in zip(losses, ref):
        assert jnp.allclose(got, want, rtol=1e-5, atol=1e-5), (got, want)

    print("KERNEL_OK")
</pallas_src>

<mosaic_0001>
module attributes {stable_mosaic.version = 11 : i64} {
  func.func @_fused_loss_kernel(%arg0: i32, %arg1: i32, %arg2: memref<16x32xf32, #tpu.memory_space<vmem>>, %arg3: memref<16x32xf32, #tpu.memory_space<vmem>>, %arg4: memref<1x32xf32, #tpu.memory_space<vmem>>, %arg5: memref<1x32xi32, #tpu.memory_space<vmem>>, %arg6: memref<1x32xf32, #tpu.memory_space<vmem>>, %arg7: memref<1x32xf32, #tpu.memory_space<vmem>>, %arg8: memref<1x32xf32, #tpu.memory_space<vmem>>, %arg9: memref<1x32xf32, #tpu.memory_space<vmem>>, %arg10: memref<1x1x128xf32, #tpu.memory_space<vmem>>, %arg11: memref<8x32xf32, #tpu.memory_space<vmem>>) attributes {dimension_semantics = [#tpu.dimension_semantics<parallel>, #tpu.dimension_semantics<arbitrary>], iteration_bounds = array<i64: 2, 1>, scalar_prefetch = 0 : i64, scratch_operands = 1 : i64, tpu.core_type = #tpu.core_type<tc>, window_params = [{transform_indices = @transform_0, window_bounds = array<i64: 16, 32>}, {transform_indices = @transform_1, window_bounds = array<i64: 16, 32>}, {pipeline_mode = #tpu.pipeline_mode<synchronous>, transform_indices = @transform_2, window_bounds = array<i64: 1, 32>}, {pipeline_mode = #tpu.pipeline_mode<synchronous>, transform_indices = @transform_3, window_bounds = array<i64: 1, 32>}, {pipeline_mode = #tpu.pipeline_mode<synchronous>, transform_indices = @transform_4, window_bounds = array<i64: 1, 32>}, {pipeline_mode = #tpu.pipeline_mode<synchronous>, transform_indices = @transform_5, window_bounds = array<i64: 1, 32>}, {pipeline_mode = #tpu.pipeline_mode<synchronous>, transform_indices = @transform_6, window_bounds = array<i64: 1, 32>}, {pipeline_mode = #tpu.pipeline_mode<synchronous>, transform_indices = @transform_7, window_bounds = array<i64: 1, 32>}, {transform_indices = @transform_8, window_bounds = array<i64: 1, 1, 128>}]} {
    %c0_i32 = arith.constant 0 : i32
    %0 = arith.cmpi eq, %arg1, %c0_i32 : i32
    %1 = arith.extui %0 : i1 to i32
    %c0_i32_0 = arith.constant 0 : i32
    %2 = arith.cmpi ne, %1, %c0_i32_0 : i32
    scf.if %2 {
      %cst_16 = arith.constant 0.000000e+00 : f32
      %46 = vector.broadcast %cst_16 : f32 to vector<8x32xf32>
      %c0_17 = arith.constant 0 : index
      %c0_18 = arith.constant 0 : index
      %47 = vector.load %arg11[%c0_17, %c0_18] : memref<8x32xf32, #tpu.memory_space<vmem>>, vector<8x32xf32>
      tpu.vector_store %arg11[%c0_17, %c0_18], %46 {strides = array<i32>} : memref<8x32xf32, #tpu.memory_space<vmem>>, vector<8x32xf32>,
    } else {
    }
    %c1_i32 = arith.constant 1 : i32
    %3 = arith.muli %arg0, %c1_i32 : i32
    %4 = arith.addi %3, %arg1 : i32
    %c16_i32 = arith.constant 16 : i32
    %5 = arith.muli %4, %c16_i32 : i32
    %6 = tpu.iota {dimensions = array<i32: 0>} : vector<8x32xi32>
    %cst = arith.constant 0.000000e+00 : f32
    %7 = vector.broadcast %cst : f32 to vector<8x32xf32>
    %c0_i32_1 = arith.constant 0 : i32
    %c8_i32 = arith.constant 8 : i32
    %8 = arith.muli %c0_i32_1, %c8_i32 : i32
    %9 = tpu.assume_multiple %8, 8 : i32
    %10 = arith.index_cast %9 : i32 to index
    %c0 = arith.constant 0 : index
    %11 = vector.load %arg2[%10, %c0] : memref<16x32xf32, #tpu.memory_space<vmem>>, vector<8x32xf32>
    %12 = arith.index_cast %9 : i32 to index
    %c0_2 = arith.constant 0 : index
    %13 = vector.load %arg3[%12, %c0_2] : memref<16x32xf32, #tpu.memory_space<vmem>>, vector<8x32xf32>
    %14 = arith.addi %5, %9 : i32
    %15 = vector.broadcast %14 : i32 to vector<8x32xi32>
    %16 = arith.addi %15, %6 : vector<8x32xi32>
    %c32_i32 = arith.constant 32 : i32
    %17 = vector.broadcast %c32_i32 : i32 to vector<8x32xi32>
    %18 = arith.cmpi slt, %16, %17 : vector<8x32xi32>
    %19 = arith.subf %11, %13 : vector<8x32xf32>
    %20 = math.absf %19 : vector<8x32xf32>
    %cst_3 = arith.constant 0.000000e+00 : f32
    %21 = vector.broadcast %cst_3 : f32 to vector<8x32xf32>
    %22 = arith.select %18, %20, %21 : vector<8x32xi1>, vector<8x32xf32>
    %23 = arith.addf %7, %22 : vector<8x32xf32>
    %c1_i32_4 = arith.constant 1 : i32
    %c8_i32_5 = arith.constant 8 : i32
    %24 = arith.muli %c1_i32_4, %c8_i32_5 : i32
    %25 = tpu.assume_multiple %24, 8 : i32
    %26 = arith.index_cast %25 : i32 to index
    %c0_6 = arith.constant 0 : index
    %27 = vector.load %arg2[%26, %c0_6] : memref<16x32xf32, #tpu.memory_space<vmem>>, vector<8x32xf32>
    %28 = arith.index_cast %25 : i32 to index
    %c0_7 = arith.constant 0 : index
    %29 = vector.load %arg3[%28, %c0_7] : memref<16x32xf32, #tpu.memory_space<vmem>>, vector<8x32xf32>
    %30 = arith.addi %5, %25 : i32
    %31 = vector.broadcast %30 : i32 to vector<8x32xi32>
    %32 = arith.addi %31, %6 : vector<8x32xi32>
    %c32_i32_8 = arith.constant 32 : i32
    %33 = vector.broadcast %c32_i32_8 : i32 to vector<8x32xi32>
    %34 = arith.cmpi slt, %32, %33 : vector<8x32xi32>
    %35 = arith.subf %27, %29 : vector<8x32xf32>
    %36 = math.absf %35 : vector<8x32xf32>
    %cst_9 = arith.constant 0.000000e+00 : f32
    %37 = vector.broadcast %cst_9 : f32 to vector<8x32xf32>
    %38 = arith.select %34, %36, %37 : vector<8x32xi1>, vector<8x32xf32>
    %39 = arith.addf %23, %38 : vector<8x32xf32>
    %c2_i32 = arith.constant 2 : i32
    %c0_10 = arith.constant 0 : index
    %c0_11 = arith.constant 0 : index
    %40 = vector.load %arg11[%c0_10, %c0_11] : memref<8x32xf32, #tpu.memory_space<vmem>>, vector<8x32xf32>
    %41 = arith.addf %40, %39 : vector<8x32xf32>
    %c0_12 = arith.constant 0 : index
    %c0_13 = arith.constant 0 : index
    %42 = vector.load %arg11[%c0_12, %c0_13] : memref<8x32xf32, #tpu.memory_space<vmem>>, vector<8x32xf32>
    tpu.vector_store %arg11[%c0_12, %c0_13], %41 {strides = array<i32>} : memref<8x32xf32, #tpu.memory_space<vmem>>, vector<8x32xf32>,
    %c0_i32_14 = arith.constant 0 : i32
    %43 = arith.cmpi eq, %arg1, %c0_i32_14 : i32
    %44 = arith.extui %43 : i1 to i32
    %c0_i32_15 = arith.constant 0 : i32
    %45 = arith.cmpi ne, %44, %c0_i32_15 : i32
    scf.if %45 {
      %46 = tpu.iota {dimensions = array<i32: 1>} : vector<1x128xi32>
      %c0_16 = arith.constant 0 : index
      %c0_17 = arith.constant 0 : index
      %47 = vector.load %arg11[%c0_16, %c0_17] : memref<8x32xf32, #tpu.memory_space<vmem>>, vector<8x32xf32>
      %48 = vector.shape_cast %47 : vector<8x32xf32> to vector<1x8x32xf32>
      %cst_18 = arith.constant dense<0.000000e+00> : vector<1xf32>
      %49 = vector.multi_reduction <add>, %48, %cst_18 [1, 2] : vector<1x8x32xf32> to vector<1xf32>
      %50 = vector.shape_cast %49 : vector<1xf32> to vector<1x1x1xf32>
      %51 = vector.extract %50[0, 0, 0] : f32 from vector<1x1x1xf32>
      %52 = vector.broadcast %51 : f32 to vector<1x1xf32>
      %cst_19 = arith.constant 9.765625E-4 : f32
      %53 = vector.broadcast %cst_19 : f32 to vector<1x1xf32>
      %54 = arith.mulf %52, %53 : vector<1x1xf32>
      %c0_i32_20 = arith.constant 0 : i32
      %55 = vector.broadcast %c0_i32_20 : i32 to vector<1x128xi32>
      %56 = arith.cmpi eq, %46, %55 : vector<1x128xi32>
      %cst_21 = arith.constant 0.000000e+00 : f32
      %57 = vector.shape_cast %54 : vector<1x1xf32> to vector<1x1xf32>
      %58 = vector.broadcast %57 : vector<1x1xf32> to vector<1x128xf32>
      %59 = vector.broadcast %cst_21 : f32 to vector<1x128xf32>
      %60 = arith.select %56, %58, %59 : vector<1x128xi1>, vector<1x128xf32>
      %c0_22 = arith.constant 0 : index
      %c0_23 = arith.constant 0 : index
      %61 = vector.load %arg4[%c0_22, %c0_23] : memref<1x32xf32, #tpu.memory_space<vmem>>, vector<1x32xf32>
      %c0_24 = arith.constant 0 : index
      %c0_25 = arith.constant 0 : index
      %62 = vector.load %arg5[%c0_24, %c0_25] : memref<1x32xi32, #tpu.memory_space<vmem>>, vector<1x32xi32>
      %63 = arith.sitofp %62 : vector<1x32xi32> to vector<1x32xf32>
      %64 = arith.subf %61, %63 : vector<1x32xf32>
      %65 = arith.mulf %64, %64 : vector<1x32xf32>
      %66 = vector.shape_cast %65 : vector<1x32xf32> to vector<1x1x32xf32>
      %cst_26 = arith.constant dense<0.000000e+00> : vector<1xf32>
      %67 = vector.multi_reduction <add>, %66, %cst_26 [1, 2] : vector<1x1x32xf32> to vector<1xf32>
      %68 = vector.shape_cast %67 : vector<1xf32> to vector<1x1x1xf32>
      %69 = vector.extract %68[0, 0, 0] : f32 from vector<1x1x1xf32>
      %70 = vector.broadcast %69 : f32 to vector<1x1xf32>
      %cst_27 = arith.constant 3.125000e-02 : f32
      %71 = vector.broadcast %cst_27 : f32 to vector<1x1xf32>
      %72 = arith.mulf %70, %71 : vector<1x1xf32>
      %c1_i32_28 = arith.constant 1 : i32
      %73 = vector.broadcast %c1_i32_28 : i32 to vector<1x128xi32>
      %74 = arith.cmpi eq, %46, %73 : vector<1x128xi32>
      %75 = vector.shape_cast %72 : vector<1x1xf32> to vector<1x1xf32>
      %76 = vector.broadcast %75 : vector<1x1xf32> to vector<1x128xf32>
      %77 = arith.select %74, %76, %60 : vector<1x128xi1>, vector<1x128xf32>
      %c0_29 = arith.constant 0 : index
      %c0_30 = arith.constant 0 : index
      %78 = vector.load %arg6[%c0_29, %c0_30] : memref<1x32xf32, #tpu.memory_space<vmem>>, vector<1x32xf32>
      %c0_31 = arith.constant 0 : index
      %c0_32 = arith.constant 0 : index
      %79 = vector.load %arg7[%c0_31, %c0_32] : memref<1x32xf32, #tpu.memory_space<vmem>>, vector<1x32xf32>
      %80 = arith.subf %78, %79 : vector<1x32xf32>
      %81 = arith.mulf %80, %80 : vector<1x32xf32>
      %82 = vector.shape_cast %81 : vector<1x32xf32> to vector<1x1x32xf32>
      %cst_33 = arith.constant dense<0.000000e+00> : vector<1xf32>
      %83 = vector.multi_reduction <add>, %82, %cst_33 [1, 2] : vector<1x1x32xf32> to vector<1xf32>
      %84 = vector.shape_cast %83 : vector<1xf32> to vector<1x1x1xf32>
      %85 = vector.extract %84[0, 0, 0] : f32 from vector<1x1x1xf32>
      %86 = vector.broadcast %85 : f32 to vector<1x1xf32>
      %cst_34 = arith.constant 3.125000e-02 : f32
      %87 = vector.broadcast %cst_34 : f32 to vector<1x1xf32>
      %88 = arith.mulf %86, %87 : vector<1x1xf32>
      %c2_i32_35 = arith.constant 2 : i32
      %89 = vector.broadcast %c2_i32_35 : i32 to vector<1x128xi32>
      %90 = arith.cmpi eq, %46, %89 : vector<1x128xi32>
      %91 = vector.shape_cast %88 : vector<1x1xf32> to vector<1x1xf32>
      %92 = vector.broadcast %91 : vector<1x1xf32> to vector<1x128xf32>
      %93 = arith.select %90, %92, %77 : vector<1x128xi1>, vector<1x128xf32>
      %c0_36 = arith.constant 0 : index
      %c0_37 = arith.constant 0 : index
      %94 = vector.load %arg8[%c0_36, %c0_37] : memref<1x32xf32, #tpu.memory_space<vmem>>, vector<1x32xf32>
      %c0_38 = arith.constant 0 : index
      %c0_39 = arith.constant 0 : index
      %95 = vector.load %arg9[%c0_38, %c0_39] : memref<1x32xf32, #tpu.memory_space<vmem>>, vector<1x32xf32>
      %96 = arith.subf %94, %95 : vector<1x32xf32>
      %97 = arith.mulf %96, %96 : vector<1x32xf32>
      %98 = vector.shape_cast %97 : vector<1x32xf32> to vector<1x1x32xf32>
      %cst_40 = arith.constant dense<0.000000e+00> : vector<1xf32>
      %99 = vector.multi_reduction <add>, %98, %cst_40 [1, 2] : vector<1x1x32xf32> to vector<1xf32>
      %100 = vector.shape_cast %99 : vector<1xf32> to vector<1x1x1xf32>
      %101 = vector.extract %100[0, 0, 0] : f32 from vector<1x1x1xf32>
      %102 = vector.broadcast %101 : f32 to vector<1x1xf32>
      %cst_41 = arith.constant 3.125000e-02 : f32
      %103 = vector.broadcast %cst_41 : f32 to vector<1x1xf32>
      %104 = arith.mulf %102, %103 : vector<1x1xf32>
      %c3_i32 = arith.constant 3 : i32
      %105 = vector.broadcast %c3_i32 : i32 to vector<1x128xi32>
      %106 = arith.cmpi eq, %46, %105 : vector<1x128xi32>
      %107 = vector.shape_cast %104 : vector<1x1xf32> to vector<1x1xf32>
      %108 = vector.broadcast %107 : vector<1x1xf32> to vector<1x128xf32>
      %109 = arith.select %106, %108, %93 : vector<1x128xi1>, vector<1x128xf32>
      %c0_42 = arith.constant 0 : index
      %c0_43 = arith.constant 0 : index
      %c0_44 = arith.constant 0 : index
      %110 = vector.load %arg10[%c0_42, %c0_43, %c0_44] : memref<1x1x128xf32, #tpu.memory_space<vmem>>, vector<1x1x128xf32>
      %111 = vector.shape_cast %110 : vector<1x1x128xf32> to vector<1x128xf32>
      %112 = vector.shape_cast %109 : vector<1x128xf32> to vector<1x1x128xf32>
      tpu.vector_store %arg10[%c0_42, %c0_43, %c0_44], %112 {strides = array<i32>} : memref<1x1x128xf32, #tpu.memory_space<vmem>>, vector<1x1x128xf32>,
    } else {
    }
    return
  }
  func.func @transform_0(%arg0: i32, %arg1: i32) -> (i32, i32) {
    %c1_i32 = arith.constant 1 : i32
    %0 = arith.muli %arg0, %c1_i32 : i32
    %1 = arith.addi %0, %arg1 : i32
    %c0_i32 = arith.constant 0 : i32
    %c0_i32_0 = arith.constant 0 : i32
    return %1, %c0_i32 : i32, i32
  }
  func.func @transform_1(%arg0: i32, %arg1: i32) -> (i32, i32) {
    %c1_i32 = arith.constant 1 : i32
    %0 = arith.muli %arg0, %c1_i32 : i32
    %1 = arith.addi %0, %arg1 : i32
    %c0_i32 = arith.constant 0 : i32
    %c0_i32_0 = arith.constant 0 : i32
    return %1, %c0_i32 : i32, i32
  }
  func.func @transform_2(%arg0: i32, %arg1: i32) -> (i32, i32) {
    %c0_i32 = arith.constant 0 : i32
    %c0_i32_0 = arith.constant 0 : i32
    %c0_i32_1 = arith.constant 0 : i32
    return %c0_i32, %c0_i32_0 : i32, i32
  }
  func.func @transform_3(%arg0: i32, %arg1: i32) -> (i32, i32) {
    %c0_i32 = arith.constant 0 : i32
    %c0_i32_0 = arith.constant 0 : i32
    %c0_i32_1 = arith.constant 0 : i32
    return %c0_i32, %c0_i32_0 : i32, i32
  }
  func.func @transform_4(%arg0: i32, %arg1: i32) -> (i32, i32) {
    %c0_i32 = arith.constant 0 : i32
    %c0_i32_0 = arith.constant 0 : i32
    %c0_i32_1 = arith.constant 0 : i32
    return %c0_i32, %c0_i32_0 : i32, i32
  }
  func.func @transform_5(%arg0: i32, %arg1: i32) -> (i32, i32) {
    %c0_i32 = arith.constant 0 : i32
    %c0_i32_0 = arith.constant 0 : i32
    %c0_i32_1 = arith.constant 0 : i32
    return %c0_i32, %c0_i32_0 : i32, i32
  }
  func.func @transform_6(%arg0: i32, %arg1: i32) -> (i32, i32) {
    %c0_i32 = arith.constant 0 : i32
    %c0_i32_0 = arith.constant 0 : i32
    %c0_i32_1 = arith.constant 0 : i32
    return %c0_i32, %c0_i32_0 : i32, i32
  }
  func.func @transform_7(%arg0: i32, %arg1: i32) -> (i32, i32) {
    %c0_i32 = arith.constant 0 : i32
    %c0_i32_0 = arith.constant 0 : i32
    %c0_i32_1 = arith.constant 0 : i32
    return %c0_i32, %c0_i32_0 : i32, i32
  }
  func.func @transform_8(%arg0: i32, %arg1: i32) -> (i32, i32, i32) {
    %c0_i32 = arith.constant 0 : i32
    %c0_i32_0 = arith.constant 0 : i32
    %c0_i32_1 = arith.constant 0 : i32
    return %arg0, %c0_i32, %c0_i32_0 : i32, i32, i32
  }
}

</mosaic_0001>

<llo_original>
// kernel: fastspeech_loss.1
$region0: #{fastspeech_loss.1}
  #allocation0 [shape = 'u32[]', space=smem, size = 0x4, offset = 0x4, fixed_abs, tag = 'smem constant byte address 0x4 - core index']
  #allocation1 [shape = 'u32[144,128]{1,0:T(1,128)}', space=vmem, size = 0x12000, scoped, tag = 'internal scratch']
  #allocation2 [shape = 'f32[8,32]{1,0:T(8,128)}', space=vmem, size = 0x1000, scoped, tag = 'scratch operand']
  %s0 = inlined_call_operand.hbm [shape: f32[32,32], index: 0, kind: input, shape index: {}]
  %s1 = inlined_call_operand.vmem [shape: f32[32,32], index: 1, kind: input, shape index: {}]
  %s2 = inlined_call_operand.vmem [shape: f32[1,32], index: 2, kind: input, shape index: {}]
  %s3 = inlined_call_operand.vmem [shape: s32[1,32], index: 3, kind: input, shape index: {}]
  %s4 = inlined_call_operand.vmem [shape: f32[1,32], index: 4, kind: input, shape index: {}]
  %s5 = inlined_call_operand.vmem [shape: f32[1,32], index: 5, kind: input, shape index: {}]
  %s6 = inlined_call_operand.vmem [shape: f32[1,32], index: 6, kind: input, shape index: {}]
  %s7 = inlined_call_operand.vmem [shape: f32[1,32], index: 7, kind: input, shape index: {}]
  %s8 = inlined_call_operand.vmem [shape: f32[2,1,128], index: 8, kind: output, shape index: {}]
  %s9 = sld [smem:[#allocation0]]
  $region77: #{fastspeech_loss.1} parent=0
    _
  %s11 = ssub.s32 1, %s9
  %s12 = scalar_select 0, %s11, %s9
  $region1: #{fastspeech_loss.1} parent=0
    #allocation3 [shape = 'u8[16384]{0}', space=vmem, size = 0x4000, scoped, tag = 'input window, operand 0']
    #allocation4 [shape = 's32[2]{0}', space=sflag, size = 0x8, scoped, tag = 'scoped memory for fastspeech_loss.1']
    %13 = vsyncpa [#allocation4], 0
    %s14 = scalar_lea.sflag [#allocation4], 1
    %15 = vsyncpa %s14, 0
    loop: start=0, step=1, limit=4
    $region2: #{fastspeech_loss.1} parent=1 // loop_pre_header
      _
    $region3: #{fastspeech_loss.1} parent=1 // loop_header
      %s17 = sphi 0, %s21
      %p18 = scmp.ge.s32.totalorder %s17, 4
      %s24 = sphi 0, %s36
      %s25 = sphi 0, %s32
      %s26 = sphi 0, %s24
      %s27 = sphi 0, %s25
      %s28 = sphi 0, %s26
      %s29 = sphi 0, %s27
      %s41 = sphi 0, %s43
      %s44 = sphi 0, %s41
      %s45 = sphi 0, %s44
      %s61 = sphi 0, %s45
      %s69 = sphi 0, %s71
      %s72 = sphi 0, %s69
      %s73 = sphi 0, %s72
      %s89 = sphi 0, %s73
      %s93 = sphi 0, %s93
      %s95 = sphi 0, %s93
      %s96 = sphi 0, %s95
      %s110 = sphi 0, %s96
      %s114 = sphi 0, %s114
      %s116 = sphi 0, %s114
      %s117 = sphi 0, %s116
      %s131 = sphi 0, %s117
      %s135 = sphi 0, %s135
      %s137 = sphi 0, %s135
      %s138 = sphi 0, %s137
      %s152 = sphi 0, %s138
      %s156 = sphi 0, %s156
      %s158 = sphi 0, %s156
      %s159 = sphi 0, %s158
      %s173 = sphi 0, %s159
      %s177 = sphi 0, %s177
      %s179 = sphi 0, %s177
      %s180 = sphi 0, %s179
      %s194 = sphi 0, %s180
      %s198 = sphi 0, %s198
      %s200 = sphi 0, %s198
      %s201 = sphi 0, %s200
      %s215 = sphi 0, %s201
      %s221 = sphi 0, %s223
      %s224 = sphi 0, %s221
      %s225 = sphi 0, %s224
      %s241 = sphi 0, %s225
    $region4: #{fastspeech_loss.1} parent=1 // loop_header_branch
      %20 = sbr.rel (%p18) target = $region8
    $region5: #{fastspeech_loss.1} parent=1 // loop_body
      %s22 = ssub.s32 %s17, 1
      %s23 = ssub.s32 %s17, 2
      %s30 = sadd.s32 1, %s25
      %p31 = scmp.ge.s32.totalorder %s30, 1
      %s32 = scalar_select %p31, 0, %s30
      %s33 = sadd.s32 1, %s24
      %s34 = scalar_select %p31, %s33, %s24
      %p35 = scmp.ge.s32.totalorder %s34, 2
      %s36 = scalar_select %p35, 0, %s34
      %s37 = sadd.s32 %s24, %s25
      %s38 = sadd.s32 %s36, %s32
      %s39 = ssub.s32 %s37, %s38
      %p40 = scmp.eq.s32.totalorder %s39, 0
      %s42 = sadd.s32 %s41, 1
      %s43 = scalar_select %p40, %s41, %s42
      %p46 = pneg %p40
      %p47 = scmp.eq.s32.totalorder %s17, 1
      %p48 = por %p46, %p47
      %p49 = scmp.ne.s32.totalorder %s41, %s44
      %p50 = scmp.eq.s32.totalorder %s17, 0
      %p51 = por %p49, %p50
      %p52 = scmp.ne.s32.totalorder %s41, %s44
      %p53 = scmp.eq.s32.totalorder %s22, 1
      %p54 = por %p52, %p53
      %p55 = scmp.ne.s32.totalorder %s44, %s45
      %p56 = scmp.eq.s32.totalorder %s22, 0
      %p57 = por %p55, %p56
      %p58 = scmp.ne.s32.totalorder %s44, %s45
      %p59 = scmp.eq.s32.totalorder %s23, 1
      %p60 = por %p58, %p59
      %p62 = scmp.ne.s32.totalorder %s45, %s61
      %p63 = scmp.eq.s32.totalorder %s23, 0
      %p64 = por %p62, %p63
      %s65 = sadd.s32 %s24, %s25
      %s66 = sadd.s32 %s36, %s32
      %s67 = ssub.s32 %s65, %s66
      %p68 = scmp.eq.s32.totalorder %s67, 0
      %s70 = sadd.s32 %s69, 1
      %s71 = scalar_select %p68, %s69, %s70
      %p74 = pneg %p68
      %p75 = scmp.eq.s32.totalorder %s17, 1
      %p76 = por %p74, %p75
      %p77 = scmp.ne.s32.totalorder %s69, %s72
      %p78 = scmp.eq.s32.totalorder %s17, 0
      %p79 = por %p77, %p78
      %p80 = scmp.ne.s32.totalorder %s69, %s72
      %p81 = scmp.eq.s32.totalorder %s22, 1
      %p82 = por %p80, %p81
      %p83 = scmp.ne.s32.totalorder %s72, %s73
      %p84 = scmp.eq.s32.totalorder %s22, 0
      %p85 = por %p83, %p84
      %p86 = scmp.ne.s32.totalorder %s72, %s73
      %p87 = scmp.eq.s32.totalorder %s23, 1
      %p88 = por %p86, %p87
      %p90 = scmp.ne.s32.totalorder %s73, %s89
      %p91 = scmp.eq.s32.totalorder %s23, 0
      %p92 = por %p90, %p91
      %s94 = sadd.s32 %s93, 1
      %p97 = scmp.eq.s32.totalorder %s17, 1
      %p98 = scmp.ne.s32.totalorder %s93, %s95
      %p99 = scmp.eq.s32.totalorder %s17, 0
      %p100 = por %p98, %p99
      %p101 = scmp.ne.s32.totalorder %s93, %s95
      %p102 = scmp.eq.s32.totalorder %s22, 1
      %p103 = por %p101, %p102
      %p104 = scmp.ne.s32.totalorder %s95, %s96
      %p105 = scmp.eq.s32.totalorder %s22, 0
      %p106 = por %p104, %p105
      %p107 = scmp.ne.s32.totalorder %s95, %s96
      %p108 = scmp.eq.s32.totalorder %s23, 1
      %p109 = por %p107, %p108
      %p111 = scmp.ne.s32.totalorder %s96, %s110
      %p112 = scmp.eq.s32.totalorder %s23, 0
      %p113 = por %p111, %p112
      %s115 = sadd.s32 %s114, 1
      %p118 = scmp.eq.s32.totalorder %s17, 1
      %p119 = scmp.ne.s32.totalorder %s114, %s116
      %p120 = scmp.eq.s32.totalorder %s17, 0
      %p121 = por %p119, %p120
      %p122 = scmp.ne.s32.totalorder %s114, %s116
      %p123 = scmp.eq.s32.totalorder %s22, 1
      %p124 = por %p122, %p123
      %p125 = scmp.ne.s32.totalorder %s116, %s117
      %p126 = scmp.eq.s32.totalorder %s22, 0
      %p127 = por %p125, %p126
      %p128 = scmp.ne.s32.totalorder %s116, %s117
      %p129 = scmp.eq.s32.totalorder %s23, 1
      %p130 = por %p128, %p129
      %p132 = scmp.ne.s32.totalorder %s117, %s131
      %p133 = scmp.eq.s32.totalorder %s23, 0
      %p134 = por %p132, %p133
      %s136 = sadd.s32 %s135, 1
      %p139 = scmp.eq.s32.totalorder %s17, 1
      %p140 = scmp.ne.s32.totalorder %s135, %s137
      %p141 = scmp.eq.s32.totalorder %s17, 0
      %p142 = por %p140, %p141
      %p143 = scmp.ne.s32.totalorder %s135, %s137
      %p144 = scmp.eq.s32.totalorder %s22, 1
      %p145 = por %p143, %p144
      %p146 = scmp.ne.s32.totalorder %s137, %s138
      %p147 = scmp.eq.s32.totalorder %s22, 0
      %p148 = por %p146, %p147
      %p149 = scmp.ne.s32.totalorder %s137, %s138
      %p150 = scmp.eq.s32.totalorder %s23, 1
      %p151 = por %p149, %p150
      %p153 = scmp.ne.s32.totalorder %s138, %s152
      %p154 = scmp.eq.s32.totalorder %s23, 0
      %p155 = por %p153, %p154
      %s157 = sadd.s32 %s156, 1
      %p160 = scmp.eq.s32.totalorder %s17, 1
      %p161 = scmp.ne.s32.totalorder %s156, %s158
      %p162 = scmp.eq.s32.totalorder %s17, 0
      %p163 = por %p161, %p162
      %p164 = scmp.ne.s32.totalorder %s156, %s158
      %p165 = scmp.eq.s32.totalorder %s22, 1
      %p166 = por %p164, %p165
      %p167 = scmp.ne.s32.totalorder %s158, %s159
      %p168 = scmp.eq.s32.totalorder %s22, 0
      %p169 = por %p167, %p168
      %p170 = scmp.ne.s32.totalorder %s158, %s159
      %p171 = scmp.eq.s32.totalorder %s23, 1
      %p172 = por %p170, %p171
      %p174 = scmp.ne.s32.totalorder %s159, %s173
      %p175 = scmp.eq.s32.totalorder %s23, 0
      %p176 = por %p174, %p175
      %s178 = sadd.s32 %s177, 1
      %p181 = scmp.eq.s32.totalorder %s17, 1
      %p182 = scmp.ne.s32.totalorder %s177, %s179
      %p183 = scmp.eq.s32.totalorder %s17, 0
      %p184 = por %p182, %p183
      %p185 = scmp.ne.s32.totalorder %s177, %s179
      %p186 = scmp.eq.s32.totalorder %s22, 1
      %p187 = por %p185, %p186
      %p188 = scmp.ne.s32.totalorder %s179, %s180
      %p189 = scmp.eq.s32.totalorder %s22, 0
      %p190 = por %p188, %p189
      %p191 = scmp.ne.s32.totalorder %s179, %s180
      %p192 = scmp.eq.s32.totalorder %s23, 1
      %p193 = por %p191, %p192
      %p195 = scmp.ne.s32.totalorder %s180, %s194
      %p196 = scmp.eq.s32.totalorder %s23, 0
      %p197 = por %p195, %p196
      %s199 = sadd.s32 %s198, 1
      %p202 = scmp.eq.s32.totalorder %s17, 1
      %p203 = scmp.ne.s32.totalorder %s198, %s200
      %p204 = scmp.eq.s32.totalorder %s17, 0
      %p205 = por %p203, %p204
      %p206 = scmp.ne.s32.totalorder %s198, %s200
      %p207 = scmp.eq.s32.totalorder %s22, 1
      %p208 = por %p206, %p207
      %p209 = scmp.ne.s32.totalorder %s200, %s201
      %p210 = scmp.eq.s32.totalorder %s22, 0
      %p211 = por %p209, %p210
      %p212 = scmp.ne.s32.totalorder %s200, %s201
      %p213 = scmp.eq.s32.totalorder %s23, 1
      %p214 = por %p212, %p213
      %p216 = scmp.ne.s32.totalorder %s201, %s215
      %p217 = scmp.eq.s32.totalorder %s23, 0
      %p218 = por %p216, %p217
      %s219 = ssub.s32 %s24, %s36
      %p220 = scmp.eq.s32.totalorder %s219, 0
      %s222 = sadd.s32 %s221, 1
      %s223 = scalar_select %p220, %s221, %s222
      %p226 = pneg %p220
      %p227 = scmp.eq.s32.totalorder %s17, 1
      %p228 = por %p226, %p227
      %p229 = scmp.ne.s32.totalorder %s221, %s224
      %p230 = scmp.eq.s32.totalorder %s17, 0
      %p231 = por %p229, %p230
      %p232 = scmp.ne.s32.totalorder %s221, %s224
      %p233 = scmp.eq.s32.totalorder %s22, 1
      %p234 = por %p232, %p233
      %p235 = scmp.ne.s32.totalorder %s224, %s225
      %p236 = scmp.eq.s32.totalorder %s22, 0
      %p237 = por %p235, %p236
      %p238 = scmp.ne.s32.totalorder %s224, %s225
      %p239 = scmp.eq.s32.totalorder %s23, 1
      %p240 = por %p238, %p239
      %p242 = scmp.ne.s32.totalorder %s225, %s241
      %p243 = scmp.eq.s32.totalorder %s23, 0
      %p244 = por %p242, %p243
      %p245 = scmp.le.s32.totalorder 1, %s17
      %p246 = scmp.lt.s32.totalorder %s17, 3
      %p247 = pnand %p245, %p246
      %p248 = pneg %p247
      // Predicated region
      $region9: #{fastspeech_loss.1} parent=5 // pred_check
        _
      $region10: #{fastspeech_loss.1} parent=5 // pred_check_branch
        %250 = sbr.rel (%p247) target = $region12
      $region11: #{fastspeech_loss.1} parent=5 // pred_region
        %s251 = ssub.s32 %s17, 1
        // Predicated region
        $region13: #{fastspeech_loss.1} parent=11 // pred_check
          %p252 = pneg %p106
        $region14: #{fastspeech_loss.1} parent=11 // pred_check_branch
          %254 = sbr.rel (%p252) target = $region16
        $region15: #{fastspeech_loss.1} parent=11 // pred_region
          _
        $region16: #{fastspeech_loss.1} parent=11 // pred_fallthru
          _
        // Predicated region
        $region17: #{fastspeech_loss.1} parent=11 // pred_check
          %p255 = pneg %p127
        $region18: #{fastspeech_loss.1} parent=11 // pred_check_branch
          %257 = sbr.rel (%p255) target = $region20
        $region19: #{fastspeech_loss.1} parent=11 // pred_region
          _
        $region20: #{fastspeech_loss.1} parent=11 // pred_fallthru
          _
        // Predicated region
        $region21: #{fastspeech_loss.1} parent=11 // pred_check
          %p258 = pneg %p148
        $region22: #{fastspeech_loss.1} parent=11 // pred_check_branch
          %260 = sbr.rel (%p258) target = $region24
        $region23: #{fastspeech_loss.1} parent=11 // pred_region
          _
        $region24: #{fastspeech_loss.1} parent=11 // pred_fallthru
          _
        // Predicated region
        $region25: #{fastspeech_loss.1} parent=11 // pred_check
          %p261 = pneg %p169
        $region26: #{fastspeech_loss.1} parent=11 // pred_check_branch
          %263 = sbr.rel (%p261) target = $region28
        $region27: #{fastspeech_loss.1} parent=11 // pred_region
          _
        $region28: #{fastspeech_loss.1} parent=11 // pred_fallthru
          _
        // Predicated region
        $region29: #{fastspeech_loss.1} parent=11 // pred_check
          %p264 = pneg %p190
        $region30: #{fastspeech_loss.1} parent=11 // pred_check_branch
          %266 = sbr.rel (%p264) target = $region32
        $region31: #{fastspeech_loss.1} parent=11 // pred_region
          _
        $region32: #{fastspeech_loss.1} parent=11 // pred_fallthru
          _
        // Predicated region
        $region33: #{fastspeech_loss.1} parent=11 // pred_check
          %p267 = pneg %p211
        $region34: #{fastspeech_loss.1} parent=11 // pred_check_branch
          %269 = sbr.rel (%p267) target = $region36
        $region35: #{fastspeech_loss.1} parent=11 // pred_region
          _
        $region36: #{fastspeech_loss.1} parent=11 // pred_fallthru
          _
      $region12: #{fastspeech_loss.1} parent=5 // pred_fallthru
        _
      %p270 = scmp.lt.s32.totalorder %s17, 2
      // Predicated region
      $region37: #{fastspeech_loss.1} parent=5 // pred_check
        %p271 = pneg %p270
      $region38: #{fastspeech_loss.1} parent=5 // pred_check_branch
        %273 = sbr.rel (%p271) target = $region40
      $region39: #{fastspeech_loss.1} parent=5 // pred_region
        // Predicated region
        $region41: #{fastspeech_loss.1} parent=39 // pred_check
          %p274 = pneg %p51
        $region42: #{fastspeech_loss.1} parent=39 // pred_check_branch
          %276 = sbr.rel (%p274) target = $region44
        $region43: #{fastspeech_loss.1} parent=39 // pred_region
          %s277 = sand.u32 %s41, 1
          %s278 = scalar_lea.sflag [#allocation4], %s277
          %s279 = sand.u32 %s41, 1
          %s280 = smul.addr %s279, 16
          %s281 = scalar_lea.vmem [#allocation3], %s280
          %s282 = sadd.s32 %s24, %s25
          %s283 = smul.u32 2, %s282
          %s285 = ssub.s32 256, 256
          %286 = vsyncadd %s278, %s285
          %s287 = smul.addr %s283, 128
          %s288 = scalar_lea.hbm %s0, %s287
          %s289 = sshll.u32 %s281, 4
          %s290 = int_to_ptr.vmem [resolvable:$true] %s289
          %295 = dma.hbm_to_vmem [thread:$0]  %s288, 256, %s290, %s278, 128, 128, 8
        $region44: #{fastspeech_loss.1} parent=39 // pred_fallthru
          _
        // Predicated region
        $region45: #{fastspeech_loss.1} parent=39 // pred_check
          %p296 = pneg %p79
        $region46: #{fastspeech_loss.1} parent=39 // pred_check_branch
          %298 = sbr.rel (%p296) target = $region48
        $region47: #{fastspeech_loss.1} parent=39 // pred_region
          %s299 = sadd.s32 %s24, %s25
          %s300 = smul.u32 2, %s299
          %p301 = scmp.lt.s32.totalorder %s300, 3
          %s302 = scalar_select %p301, %s300, 3
          %s303 = smul.addr %s302, 8
          %s304 = scalar_lea.vmem %s1, %s303
          %s305 = sadd.s32 %s24, %s25
          %s306 = smul.u32 2, %s305
        $region48: #{fastspeech_loss.1} parent=39 // pred_fallthru
          _
      $region40: #{fastspeech_loss.1} parent=5 // pred_fallthru
        _
      %p307 = scmp.le.s32.totalorder 1, %s17
      %p308 = scmp.lt.s32.totalorder %s17, 3
      %p309 = pnand %p307, %p308
      %p310 = pneg %p309
      // Predicated region
      $region49: #{fastspeech_loss.1} parent=5 // pred_check
        _
      $region50: #{fastspeech_loss.1} parent=5 // pred_check_branch
        %312 = sbr.rel (%p309) target = $region52
      $region51: #{fastspeech_loss.1} parent=5 // pred_region
        %s313 = ssub.s32 %s17, 1
        %s314 = sand.u32 %s44, 1
        %s315 = scalar_lea.sflag [#allocation4], %s314
        %s316 = sand.u32 %s44, 1
        %s317 = smul.addr %s316, 16
        %s318 = scalar_lea.vmem [#allocation3], %s317
        // Predicated region
        $region53: #{fastspeech_loss.1} parent=51 // pred_check
          %p319 = pneg %p57
        $region54: #{fastspeech_loss.1} parent=51 // pred_check_branch
          %321 = sbr.rel (%p319) target = $region56
        $region55: #{fastspeech_loss.1} parent=51 // pred_region
          %322 = dma.done %s315, 256
        $region56: #{fastspeech_loss.1} parent=51 // pred_fallthru
          _
        %s323 = sand.u32 %s44, 1
        %s324 = scalar_lea.sflag [#allocation4], %s323
        %s325 = sand.u32 %s44, 1
        %s326 = smul.addr %s325, 16
        %s327 = scalar_lea.vmem [#allocation3], %s326
        %p328 = pneg %p57
        %p329 = pneg %p54
        %s330 = sadd.s32 %s26, %s27
        %s331 = smul.u32 2, %s330
        %p332 = scmp.lt.s32.totalorder %s331, 3
        %s333 = scalar_select %p332, %s331, 3
        %s334 = smul.addr %s333, 8
        %s335 = scalar_lea.vmem %s1, %s334
        %p336 = pneg %p85
        %p337 = pneg %p82
        %p338 = pneg %p106
        %p339 = pneg %p103
        %p340 = pneg %p127
        %p341 = pneg %p124
        %p342 = pneg %p148
        %p343 = pneg %p145
        %p344 = pneg %p169
        %p345 = pneg %p166
        %p346 = pneg %p190
        %p347 = pneg %p187
        %p348 = pneg %p211
        %p349 = pneg %p208
        %p350 = pneg %p237
        %p351 = pneg %p234
        %p352 = scmp.lt.s32.totalorder %s26, 1
        %s353 = scalar_select %p352, %s26, 1
        %s354 = scalar_lea.vmem %s8, %s353
        %s355 = sadd.s32 %s26, %s27
        %s356 = smul.u32 2, %s355
        %s357 = sadd.s32 %s26, %s27
        %s358 = smul.u32 2, %s357
        %p359 = scmp.lt.s32.totalorder %s358, 3
        %s360 = scalar_select %p359, %s358, 3
        %s361 = smul.addr %s360, 8
        %s362 = scalar_lea.vmem %s1, %s361
        %s363 = sadd.s32 %s26, %s27
        %s364 = smul.u32 2, %s363
        %p365 = scmp.lt.s32.totalorder %s26, 1
        %s366 = scalar_select %p365, %s26, 1
        %s367 = scalar_lea.vmem %s8, %s366
        %p368 = scmp.eq.s32.totalorder %s27, 0
        // Predicated region
        $region57: #{fastspeech_loss.1} parent=51 // pred_check
          %p369 = pneg %p368
        $region58: #{fastspeech_loss.1} parent=51 // pred_check_branch
          %371 = sbr.rel (%p369) target = $region60
        $region59: #{fastspeech_loss.1} parent=51 // pred_region
          %vm372 = vcmask 261120
          %373 = vst.msk [vmem:[#allocation2] sm:$0xff] %vm372, 0.0
        $region60: #{fastspeech_loss.1} parent=51 // pred_fallthru
          _
        %s374 = sadd.s32 %s26, %s27
        %s375 = smul.u32 %s374, 16
        %v376 = vlaneseq
        %v377 = vshrl.u32 %v376, 7
        %v378 = vld [vmem:[%s318] sm:$0xff]
        %v379 = vld [vmem:[%s362] sm:$0xff]
        %s380 = sadd.s32 %s375, 0
        %v381 = vstv %s380
        %v382 = vadd.s32 %v381, %v377
        %vm383 = vcmp.lt.s32.totalorder %v382, 32
        %v384 = vsub.f32 %v378, %v379
        %v385 = vand.u32 2147483647, %v384
        %v386 = vsel %vm383, %v385, 0.0
        %v387 = vadd.f32 %v386, 0.0
        %s388 = scalar_lea.vmem %s318, 8 [#allocation3]
        %v389 = vld [vmem:[%s388] sm:$0xff]
        %s390 = scalar_lea.vmem %s362, 8
        %v391 = vld [vmem:[%s390] sm:$0xff]
        %s392 = sadd.s32 %s375, 8
        %v393 = vstv %s392
        %v394 = vadd.s32 %v393, %v377
        %vm395 = vcmp.lt.s32.totalorder %v394, 32
        %v396 = vsub.f32 %v389, %v391
        %v397 = vand.u32 2147483647, %v396
        %v398 = vsel %vm395, %v397, 0.0
        %v399 = vadd.f32 %v387, %v398
        %v400 = vld [vmem:[#allocation2] sm:$0xff]
        %v401 = vadd.f32 %v400, %v399
        %vm402 = vcmask 261120
        %403 = vst.msk [vmem:[#allocation2] sm:$0xff] %vm402, %v401
        // Predicated region
        $region61: #{fastspeech_loss.1} parent=51 // pred_check
          %p404 = pneg %p368
        $region62: #{fastspeech_loss.1} parent=51 // pred_check_branch
          %406 = sbr.rel (%p404) target = $region64
        $region63: #{fastspeech_loss.1} parent=51 // pred_region
          %v407 = vlaneseq
          %v408 = vand.u32 %v407, 127
          %v409 = vld [vmem:[#allocation2] sm:$0xff]
          %v410 = vsel %vm402, %v409, 0.0
          %411 = vadd.xlane.f32.xlu0 %v410
          %v412 = vpop.xlane.xlu0 %411
          %v413 = vrot.slane %v412, 4
          %v414 = vadd.f32 %v412, %v413
          %v415 = vrot.slane %v414, 2
          %v416 = vadd.f32 %v414, %v415
          %v417 = vrot.slane %v416, 1
          %v418 = vadd.f32 %v416, %v417
          %s419 = vtos %v418
          %v420 = vstv %s419
          %v421 = vmul.f32 %v420, 0.0009765625
          %vm422 = vcmp.eq.s32.totalorder %v408, 0
          %v423 = vsel %vm422, %v421, 0.0
          %v424 = vld [vmem:[%s2] sm:$0x1]
          %v425 = vld [vmem:[%s3] sm:$0x1]
          %v426 = vcvt.s32.f32 %v425
          %v427 = vsub.f32 %v424, %v426
          %v428 = vmul.f32 %v427, %v427
          %vm429 = vcmask 253952
          %v430 = vsel %vm429, %v428, 0.0
          %431 = vadd.xlane.f32.xlu0 %v430
          %v432 = vpop.xlane.xlu0 %431
          %v433 = vrot.slane %v432, 4
          %v434 = vadd.f32 %v432, %v433
          %v435 = vrot.slane %v434, 2
          %v436 = vadd.f32 %v434, %v435
          %v437 = vrot.slane %v436, 1
          %v438 = vadd.f32 %v436, %v437
          %s439 = vtos %v438
          %v440 = vstv %s439
          %v441 = vmul.f32 %v440, 0.03125
          %vm442 = vcmp.eq.s32.totalorder %v408, 1
          %v443 = vsel %vm442, %v441, %v423
          %v444 = vld [vmem:[%s4] sm:$0x1]
          %v445 = vld [vmem:[%s5] sm:$0x1]
          %v446 = vsub.f32 %v444, %v445
          %v447 = vmul.f32 %v446, %v446
          %v448 = vsel %vm429, %v447, 0.0
          %449 = vadd.xlane.f32.xlu0 %v448
          %v450 = vpop.xlane.xlu0 %449
          %v451 = vrot.slane %v450, 4
          %v452 = vadd.f32 %v450, %v451
          %v453 = vrot.slane %v452, 2
          %v454 = vadd.f32 %v452, %v453
          %v455 = vrot.slane %v454, 1
          %v456 = vadd.f32 %v454, %v455
          %s457 = vtos %v456
          %v458 = vstv %s457
          %v459 = vmul.f32 %v458, 0.03125
          %vm460 = vcmp.eq.s32.totalorder %v408, 2
          %v461 = vsel %vm460, %v459, %v443
          %v462 = vld [vmem:[%s6] sm:$0x1]
          %v463 = vld [vmem:[%s7] sm:$0x1]
          %v464 = vsub.f32 %v462, %v463
          %v465 = vmul.f32 %v464, %v464
          %v466 = vsel %vm429, %v465, 0.0
          %467 = vadd.xlane.f32.xlu0 %v466
          %v468 = vpop.xlane.xlu0 %467
          %v469 = vrot.slane %v468, 4
          %v470 = vadd.f32 %v468, %v469
          %v471 = vrot.slane %v470, 2
          %v472 = vadd.f32 %v470, %v471
          %v473 = vrot.slane %v472, 1
          %v474 = vadd.f32 %v472, %v473
          %s475 = vtos %v474
          %v476 = vstv %s475
          %v477 = vmul.f32 %v476, 0.03125
          %vm478 = vcmp.eq.s32.totalorder %v408, 3
          %v479 = vsel %vm478, %v477, %v461
          %480 = vst [vmem:[%s367] sm:$0x1] %v479
        $region64: #{fastspeech_loss.1} parent=51 // pred_fallthru
          _
        %p481 = scmp.lt.s32.totalorder %s26, 1
        %s482 = scalar_select %p481, %s26, 1
        %s483 = scalar_lea.vmem %s8, %s482
        // Predicated region
        $region65: #{fastspeech_loss.1} parent=51 // pred_check
          %p484 = pneg %p234
        $region66: #{fastspeech_loss.1} parent=51 // pred_check_branch
          %486 = sbr.rel (%p484) target = $region68
        $region67: #{fastspeech_loss.1} parent=51 // pred_region
          _
        $region68: #{fastspeech_loss.1} parent=51 // pred_fallthru
          _
      $region52: #{fastspeech_loss.1} parent=5 // pred_fallthru
        _
      %p487 = scmp.le.s32.totalorder 2, %s17
      // Predicated region
      $region69: #{fastspeech_loss.1} parent=5 // pred_check
        %p488 = pneg %p487
      $region70: #{fastspeech_loss.1} parent=5 // pred_check_branch
        %490 = sbr.rel (%p488) target = $region72
      $region71: #{fastspeech_loss.1} parent=5 // pred_region
        %s491 = ssub.s32 %s17, 2
        // Predicated region
        $region73: #{fastspeech_loss.1} parent=71 // pred_check
          %p492 = pneg %p240
        $region74: #{fastspeech_loss.1} parent=71 // pred_check_branch
          %494 = sbr.rel (%p492) target = $region76
        $region75: #{fastspeech_loss.1} parent=71 // pred_region
          %p495 = scmp.lt.s32.totalorder %s28, 1
          %s496 = scalar_select %p495, %s28, 1
          %s497 = scalar_lea.vmem %s8, %s496
        $region76: #{fastspeech_loss.1} parent=71 // pred_fallthru
          _
      $region72: #{fastspeech_loss.1} parent=5 // pred_fallthru
        _
    $region6: #{fastspeech_loss.1} parent=1 // loop_footer
      %s21 = sadd.s32 1, %s17
    $region7: #{fastspeech_loss.1} parent=1 // loop_footer_branch
      %16 = sbr.rel target = $region3
    $region8: #{fastspeech_loss.1} parent=1 // loop_exit
      _
    %498 = vsyncpa [#allocation4], 1
    %s499 = scalar_lea.sflag [#allocation4], 1
    %500 = vsyncpa %s499, 1

</llo_original>
